<compile_context>
chip_gen: v7x
topology: tpu7x:2x2x1
jax: 0.10.0
libtpu: 0.0.40
codegen_flags: <defaults>
</compile_context>

<pallas_src>
import jax
import jax.numpy as jnp
from jax import lax
from jax.experimental import pallas as pl
from jax.experimental.pallas import tpu as pltpu


# ----------------------------------------------------------------------------
# Kernel
# ----------------------------------------------------------------------------
def _distmult_kernel(h_ref, w_ref, out_ref):
    # h_ref:   (TB, D)  bf16 tile of (e1_emb * rel_emb)
    # w_ref:   (TN, D)  bf16 tile of the entity embedding table (streamed)
    # out_ref: (TB, TN) score tile
    logits = lax.dot_general(
        h_ref[...], w_ref[...],
        dimension_numbers=(((1,), (1,)), ((), ())),   # contract D with D, no .T
        preferred_element_type=jnp.float32)            # MXU, f32 accumulate
    out_ref[...] = jax.nn.sigmoid(logits).astype(out_ref.dtype)  # EUP + VPU


# ----------------------------------------------------------------------------
# Tiling helpers
# ----------------------------------------------------------------------------
def _round_up(x, m):
    return ((x + m - 1) // m) * m


def _pick_entity_tile(n, tn_req, *, min_tiles=4, tn_min=512):
    """Pick the entity tile FIRST (N is padded to a multiple of it afterwards).

    Keep the tile large (per-grid-step overhead ~0.35 us dwarfs the DMA of a
    small tile) but shrink so the grid has >= min_tiles steps (>= 2 per
    TensorCore on v7x) when possible.
    """
    tn = min(tn_req, _round_up(n, 128))
    tn = max(128, (tn // 128) * 128)
    while tn > tn_min and pl.cdiv(n, tn) < min_tiles:
        half = (tn // 2 // 128) * 128
        if half < 128:
            break
        tn = half
    return tn


def prepare_distmult_weights(emb_e, *, tn=4096, stream_dtype=jnp.bfloat16):
    """One-time (init-path) prep of the streamed entity table.

    Casts to bf16 and pads N up to a multiple of the chosen tile so the
    per-call path never re-reads / re-writes the full f32 table.
    Returns (w_stream, tn_eff).
    """
    N, D = emb_e.shape
    tn_eff = _pick_entity_tile(N, tn)
    Np = pl.cdiv(N, tn_eff) * tn_eff
    w = emb_e.astype(stream_dtype)
    if Np != N:
        w = jnp.pad(w, ((0, Np - N), (0, 0)))   # padded rows -> logits 0 -> sliced off
    return w, tn_eff


# ----------------------------------------------------------------------------
# pallas_call wrapper
# ----------------------------------------------------------------------------
def distmult_scores(h, w, *, tn, tb, out_dtype=jnp.float32):
    """sigmoid(h @ w.T), tiled over (batch, entities).

    h: (Bp, D) bf16, Bp % tb == 0.   w: (Np, D) bf16, Np % tn == 0.
    Returns (Bp, Np) of out_dtype.
    """
    Bp, D = h.shape
    Np, D2 = w.shape
    assert D == D2
    assert Bp % tb == 0 and Np % tn == 0

    return pl.pallas_call(
        _distmult_kernel,
        out_shape=jax.ShapeDtypeStruct((Bp, Np), out_dtype),
        grid_spec=pltpu.PrefetchScalarGridSpec(
            num_scalar_prefetch=0,
            grid=(Bp // tb, Np // tn),
            in_specs=[
                pl.BlockSpec((tb, D), lambda i, j: (i, 0)),   # h tile (resident per row-block)
                pl.BlockSpec((tn, D), lambda i, j: (j, 0)),   # entity-table tile (streamed)
                # Optional sweep: pipeline_mode=pl.Buffered(3) on the W spec
                # (v6e, plenty of VMEM headroom) — tune last.
            ],
            out_specs=pl.BlockSpec((tb, tn), lambda i, j: (i, j)),
        ),
        compiler_params=pltpu.CompilerParams(
            # Both axes independent -> shard across TensorCores on v7x.
            dimension_semantics=("parallel", "parallel"),
        ),
    )(h, w)


# ----------------------------------------------------------------------------
# Full forward (embedding gather = glue, score matmul = Pallas kernel)
# ----------------------------------------------------------------------------
def my_model_forward(e1, rel, emb_e, emb_rel, w_stream, tn, *,
                     tb=256, out_dtype=jnp.float32,
                     stream_dtype=jnp.bfloat16):
    """pred = sigmoid((emb_e[e1] * emb_rel[rel]) @ emb_e.T)

    `w_stream` / `tn` come from prepare_distmult_weights (init-path, not per call).
    """
    e1_idx = e1.reshape(-1)
    rel_idx = rel.reshape(-1)
    B = e1_idx.shape[0]
    N, D = emb_e.shape

    e1_embedded = jnp.take(emb_e, e1_idx, axis=0)      # (B, D) f32
    rel_embedded = jnp.take(emb_rel, rel_idx, axis=0)  # (B, D) f32
    # inp_drop == identity at eval.  Compute the tiny (B, D) DistMult product
    # once in f32, then cast the single resident kernel input to bf16.
    h = (e1_embedded * rel_embedded).astype(stream_dtype)

    # Batch tile: multiple of 16 (bf16 sublane packing); cap so the resident
    # output tile stays small even for large serving batches (v7x 64 MiB VMEM).
    tb_eff = min(tb, _round_up(B, 16))
    Bp = _round_up(B, tb_eff)
    if Bp != B:
        h = jnp.pad(h, ((0, Bp - B), (0, 0)))

    scores = distmult_scores(h, w_stream, tn=tn, tb=tb_eff, out_dtype=out_dtype)
    return scores[:B, :N]


def init_params(key, num_entities, num_relations, embedding_dim):
    """Deterministic xavier-normal-style init; row 0 zeroed (padding_idx=0)."""
    k_e, k_r = jax.random.split(key)
    std_e = (2.0 / (num_entities + embedding_dim)) ** 0.5
    std_r = (2.0 / (num_relations + embedding_dim)) ** 0.5
    emb_e = std_e * jax.random.normal(k_e, (num_entities, embedding_dim), jnp.float32)
    emb_rel = std_r * jax.random.normal(k_r, (num_relations, embedding_dim), jnp.float32)
    emb_e = emb_e.at[0].set(0.0)      # padding_idx=0
    emb_rel = emb_rel.at[0].set(0.0)  # padding_idx=0
    return emb_e, emb_rel


if __name__ == "__main__":
    # Small shapes consistent with the module (Config.embedding_dim = 128).
    num_entities = 2048
    num_relations = 64
    embedding_dim = 128
    batch = 8

    key = jax.random.PRNGKey(0)
    k_params, k_e1, k_rel = jax.random.split(key, 3)

    emb_e, emb_rel = init_params(k_params, num_entities, num_relations, embedding_dim)

    # One-time prep of the streamed (bf16, tile-padded) entity table.
    w_stream, tn_eff = prepare_distmult_weights(emb_e, tn=4096)

    # Index inputs shaped (B, 1) like the PyTorch usage (then squeezed).
    e1 = jax.random.randint(k_e1, (batch, 1), 0, num_entities, dtype=jnp.int32)
    rel = jax.random.randint(k_rel, (batch, 1), 0, num_relations, dtype=jnp.int32)

    pred = my_model_forward(e1, rel, emb_e, emb_rel, w_stream, tn_eff)
    pred = jax.block_until_ready(pred)

    # Reference in plain JAX (same bf16 streaming, f32 accumulation).
    e1_emb = jnp.take(emb_e, e1.reshape(-1), axis=0)
    rel_emb = jnp.take(emb_rel, rel.reshape(-1), axis=0)
    h_ref = (e1_emb * rel_emb).astype(jnp.bfloat16).astype(jnp.float32)
    w_ref = emb_e.astype(jnp.bfloat16).astype(jnp.float32)
    ref = jax.nn.sigmoid(
        lax.dot_general(h_ref, w_ref, (((1,), (1,)), ((), ())),
                        precision=lax.Precision.HIGHEST))

    assert pred.shape == (batch, num_entities)
    assert jnp.allclose(pred, ref, atol=2e-3, rtol=2e-3)

    print("KERNEL_OK")
</pallas_src>

<mosaic_0001>
module attributes {stable_mosaic.version = 11 : i64} {
  func.func @_distmult_kernel(%arg0: i32, %arg1: i32, %arg2: memref<16x128xbf16, #tpu.memory_space<vmem>>, %arg3: memref<512x128xbf16, #tpu.memory_space<vmem>>, %arg4: memref<16x512xf32, #tpu.memory_space<vmem>>) attributes {dimension_semantics = [#tpu.dimension_semantics<parallel>, #tpu.dimension_semantics<parallel>], iteration_bounds = array<i64: 1, 4>, scalar_prefetch = 0 : i64, scratch_operands = 0 : i64, tpu.core_type = #tpu.core_type<tc>, window_params = [{transform_indices = @transform_0, window_bounds = array<i64: 16, 128>}, {transform_indices = @transform_1, window_bounds = array<i64: 512, 128>}, {transform_indices = @transform_2, window_bounds = array<i64: 16, 512>}]} {
    %c0 = arith.constant 0 : index
    %c0_0 = arith.constant 0 : index
    %0 = vector.load %arg2[%c0, %c0_0] : memref<16x128xbf16, #tpu.memory_space<vmem>>, vector<16x128xbf16>
    %c0_1 = arith.constant 0 : index
    %c0_2 = arith.constant 0 : index
    %1 = vector.load %arg3[%c0_1, %c0_2] : memref<512x128xbf16, #tpu.memory_space<vmem>>, vector<512x128xbf16>
    %cst = arith.constant dense<0.000000e+00> : vector<16x512xf32>
    %2 = tpu.matmul %0, %1, %cst {dimension_numbers = #tpu.dot_dimension_numbers<[1], [1], [0], [0], [0, 0, 1, 0], [], []>} : vector<16x128xbf16>, vector<512x128xbf16>, vector<16x512xf32> -> vector<16x512xf32>
    %3 = arith.negf %2 : vector<16x512xf32>
    %4 = math.exp %3 : vector<16x512xf32>
    %cst_3 = arith.constant 1.000000e+00 : f32
    %5 = vector.broadcast %cst_3 : f32 to vector<16x512xf32>
    %6 = arith.addf %5, %4 : vector<16x512xf32>
    %7 = arith.divf %5, %6 : vector<16x512xf32>
    %c0_4 = arith.constant 0 : index
    %c0_5 = arith.constant 0 : index
    %8 = vector.load %arg4[%c0_4, %c0_5] : memref<16x512xf32, #tpu.memory_space<vmem>>, vector<16x512xf32>
    tpu.vector_store %arg4[%c0_4, %c0_5], %7 {strides = array<i32>} : memref<16x512xf32, #tpu.memory_space<vmem>>, vector<16x512xf32>,
    return
  }
  func.func @transform_0(%arg0: i32, %arg1: i32) -> (i32, i32) {
    %c0_i32 = arith.constant 0 : i32
    %c0_i32_0 = arith.constant 0 : i32
    return %arg0, %c0_i32 : i32, i32
  }
  func.func @transform_1(%arg0: i32, %arg1: i32) -> (i32, i32) {
    %c0_i32 = arith.constant 0 : i32
    %c0_i32_0 = arith.constant 0 : i32
    return %arg1, %c0_i32 : i32, i32
  }
  func.func @transform_2(%arg0: i32, %arg1: i32) -> (i32, i32) {
    %c0_i32 = arith.constant 0 : i32
    return %arg0, %arg1 : i32, i32
  }
}

</mosaic_0001>

<llo_original>
// kernel: tpu_custom_call.1
$region0: #{tpu_custom_call.1}
  #allocation0 [shape = 'u32[]', space=smem, size = 0x4, offset = 0x4, fixed_abs, tag = 'smem constant byte address 0x4 - core index']
  #allocation1 [shape = 'u32[144,128]{1,0:T(1,128)}', space=vmem, size = 0x12000, scoped, tag = 'internal scratch']
  %s0 = inlined_call_operand.hbm [shape: bf16[16,128], index: 0, kind: input, shape index: {}]
  %s1 = inlined_call_operand.hbm [shape: bf16[2048,128], index: 1, kind: input, shape index: {}]
  %s2 = inlined_call_operand.hbm [shape: f32[16,2048], index: 2, kind: output, shape index: {}]
  %s3 = sld [smem:[#allocation0]]
  $region49: #{tpu_custom_call.1} parent=0
    _
  %s5 = ssub.s32 1, %s3
  %s6 = scalar_select 0, %s5, %s3
  $region1: #{tpu_custom_call.1} parent=0
    #allocation2 [shape = 'u8[4096]{0}', space=vmem, size = 0x1000, scoped, tag = 'input window, operand 0, single buffered']
    #allocation3 [shape = 's32[2]{0}', space=sflag, size = 0x8, scoped, tag = 'scoped memory for tpu_custom_call.1']
    #allocation4 [shape = 's32[2]{0}', space=sflag, size = 0x8, scoped, tag = 'scoped memory for tpu_custom_call.1']
    #allocation5 [shape = 'u8[262144]{0}', space=vmem, size = 0x40000, scoped, tag = 'input window, operand 1']
    #allocation6 [shape = 's32[2]{0}', space=sflag, size = 0x8, scoped, tag = 'scoped memory for tpu_custom_call.1']
    #allocation7 [shape = 'u8[65536]{0}', space=vmem, size = 0x10000, scoped, tag = 'output window, operand 0']
    %7 = vsyncpa [#allocation3], 0
    %8 = vsyncpa [#allocation6], 0
    %s9 = scalar_lea.sflag [#allocation6], 1
    %10 = vsyncpa %s9, 0
    %11 = vsyncpa [#allocation4], 0
    %s12 = scalar_lea.sflag [#allocation4], 1
    %13 = vsyncpa %s12, 0
    loop: start=0, step=1, limit=6
    $region2: #{tpu_custom_call.1} parent=1 // loop_pre_header
      _
    $region3: #{tpu_custom_call.1} parent=1 // loop_header
      %s15 = sphi 0, %s19
      %p16 = scmp.ge.s32.totalorder %s15, 6
      %s22 = sphi 0, %s34
      %s23 = sphi 0, %s30
      %s24 = sphi 0, %s22
      %s25 = sphi 0, %s23
      %s26 = sphi 0, %s24
      %s27 = sphi 0, %s25
      %s37 = sphi 0, %s39
      %s40 = sphi 0, %s37
      %s41 = sphi 0, %s40
      %s57 = sphi 0, %s41
      %s63 = sphi 0, %s65
      %s66 = sphi 0, %s63
      %s67 = sphi 0, %s66
      %s83 = sphi 0, %s67
      %s91 = sphi 0, %s93
      %s94 = sphi 0, %s91
      %s95 = sphi 0, %s94
      %s111 = sphi 0, %s95
    $region4: #{tpu_custom_call.1} parent=1 // loop_header_branch
      %18 = sbr.rel (%p16) target = $region8
    $region5: #{tpu_custom_call.1} parent=1 // loop_body
      %s20 = ssub.s32 %s15, 1
      %s21 = ssub.s32 %s15, 2
      %s28 = sadd.s32 1, %s23
      %p29 = scmp.ge.s32.totalorder %s28, 4
      %s30 = scalar_select %p29, 0, %s28
      %s31 = sadd.s32 1, %s22
      %s32 = scalar_select %p29, %s31, %s22
      %p33 = scmp.ge.s32.totalorder %s32, 1
      %s34 = scalar_select %p33, 0, %s32
      %s35 = ssub.s32 %s22, %s34
      %p36 = scmp.eq.s32.totalorder %s35, 0
      %s38 = sadd.s32 %s37, 1
      %s39 = scalar_select %p36, %s37, %s38
      %p42 = pneg %p36
      %p43 = scmp.eq.s32.totalorder %s15, 3
      %p44 = por %p42, %p43
      %p45 = scmp.ne.s32.totalorder %s37, %s40
      %p46 = scmp.eq.s32.totalorder %s15, 0
      %p47 = por %p45, %p46
      %p48 = scmp.ne.s32.totalorder %s37, %s40
      %p49 = scmp.eq.s32.totalorder %s20, 3
      %p50 = por %p48, %p49
      %p51 = scmp.ne.s32.totalorder %s40, %s41
      %p52 = scmp.eq.s32.totalorder %s20, 0
      %p53 = por %p51, %p52
      %p54 = scmp.ne.s32.totalorder %s40, %s41
      %p55 = scmp.eq.s32.totalorder %s21, 3
      %p56 = por %p54, %p55
      %p58 = scmp.ne.s32.totalorder %s41, %s57
      %p59 = scmp.eq.s32.totalorder %s21, 0
      %p60 = por %p58, %p59
      %s61 = ssub.s32 %s23, %s30
      %p62 = scmp.eq.s32.totalorder %s61, 0
      %s64 = sadd.s32 %s63, 1
      %s65 = scalar_select %p62, %s63, %s64
      %p68 = pneg %p62
      %p69 = scmp.eq.s32.totalorder %s15, 3
      %p70 = por %p68, %p69
      %p71 = scmp.ne.s32.totalorder %s63, %s66
      %p72 = scmp.eq.s32.totalorder %s15, 0
      %p73 = por %p71, %p72
      %p74 = scmp.ne.s32.totalorder %s63, %s66
      %p75 = scmp.eq.s32.totalorder %s20, 3
      %p76 = por %p74, %p75
      %p77 = scmp.ne.s32.totalorder %s66, %s67
      %p78 = scmp.eq.s32.totalorder %s20, 0
      %p79 = por %p77, %p78
      %p80 = scmp.ne.s32.totalorder %s66, %s67
      %p81 = scmp.eq.s32.totalorder %s21, 3
      %p82 = por %p80, %p81
      %p84 = scmp.ne.s32.totalorder %s67, %s83
      %p85 = scmp.eq.s32.totalorder %s21, 0
      %p86 = por %p84, %p85
      %s87 = ssub.s32 %s22, %s34
      %s88 = ssub.s32 %s23, %s30
      %s89 = sor.u32 %s87, %s88
      %p90 = scmp.eq.s32.totalorder %s89, 0
      %s92 = sadd.s32 %s91, 1
      %s93 = scalar_select %p90, %s91, %s92
      %p96 = pneg %p90
      %p97 = scmp.eq.s32.totalorder %s15, 3
      %p98 = por %p96, %p97
      %p99 = scmp.ne.s32.totalorder %s91, %s94
      %p100 = scmp.eq.s32.totalorder %s15, 0
      %p101 = por %p99, %p100
      %p102 = scmp.ne.s32.totalorder %s91, %s94
      %p103 = scmp.eq.s32.totalorder %s20, 3
      %p104 = por %p102, %p103
      %p105 = scmp.ne.s32.totalorder %s94, %s95
      %p106 = scmp.eq.s32.totalorder %s20, 0
      %p107 = por %p105, %p106
      %p108 = scmp.ne.s32.totalorder %s94, %s95
      %p109 = scmp.eq.s32.totalorder %s21, 3
      %p110 = por %p108, %p109
      %p112 = scmp.ne.s32.totalorder %s95, %s111
      %p113 = scmp.eq.s32.totalorder %s21, 0
      %p114 = por %p112, %p113
      %p115 = scmp.le.s32.totalorder 1, %s15
      %p116 = scmp.lt.s32.totalorder %s15, 5
      %p117 = pnand %p115, %p116
      %p118 = pneg %p117
      // Predicated region
      $region9: #{tpu_custom_call.1} parent=5 // pred_check
        _
      $region10: #{tpu_custom_call.1} parent=5 // pred_check_branch
        %120 = sbr.rel (%p117) target = $region12
      $region11: #{tpu_custom_call.1} parent=5 // pred_region
        %s121 = ssub.s32 %s15, 1
        // Predicated region
        $region13: #{tpu_custom_call.1} parent=11 // pred_check
          %p122 = pneg %p53
        $region14: #{tpu_custom_call.1} parent=11 // pred_check_branch
          %124 = sbr.rel (%p122) target = $region16
        $region15: #{tpu_custom_call.1} parent=11 // pred_region
          %s125 = smul.u32 2, %s24
          %s127 = ssub.s32 128, 128
          %128 = vsyncadd [#allocation3], %s127
          %s129 = smul.addr %s125, 64
          %s130 = scalar_lea.hbm %s0, %s129
          %s131 = sshll.u32 [#allocation2], 4
          %s132 = int_to_ptr.vmem [resolvable:$true] %s131
          %137 = dma.hbm_to_vmem [thread:$0]  %s130, 128, %s132, [#allocation3], 64, 64, 4
        $region16: #{tpu_custom_call.1} parent=11 // pred_fallthru
          _
      $region12: #{tpu_custom_call.1} parent=5 // pred_fallthru
        _
      %p138 = scmp.lt.s32.totalorder %s15, 4
      // Predicated region
      $region17: #{tpu_custom_call.1} parent=5 // pred_check
        %p139 = pneg %p138
      $region18: #{tpu_custom_call.1} parent=5 // pred_check_branch
        %141 = sbr.rel (%p139) target = $region20
      $region19: #{tpu_custom_call.1} parent=5 // pred_region
        // Predicated region
        $region21: #{tpu_custom_call.1} parent=19 // pred_check
          %p142 = pneg %p73
        $region22: #{tpu_custom_call.1} parent=19 // pred_check_branch
          %144 = sbr.rel (%p142) target = $region24
        $region23: #{tpu_custom_call.1} parent=19 // pred_region
          %s145 = sand.u32 %s63, 1
          %s146 = scalar_lea.sflag [#allocation6], %s145
          %s147 = sand.u32 %s63, 1
          %s148 = smul.addr %s147, 256
          %s149 = scalar_lea.vmem [#allocation5], %s148
          %s150 = smul.u32 64, %s23
          %s152 = ssub.s32 4096, 4096
          %153 = vsyncadd %s146, %s152
          %s154 = smul.addr %s150, 64
          %s155 = scalar_lea.hbm %s1, %s154
          %s156 = sshll.u32 %s149, 4
          %s157 = int_to_ptr.vmem [resolvable:$true] %s156
          %162 = dma.hbm_to_vmem [thread:$0]  %s155, 4096, %s157, %s146, 64, 64, 4
        $region24: #{tpu_custom_call.1} parent=19 // pred_fallthru
          _
      $region20: #{tpu_custom_call.1} parent=5 // pred_fallthru
        _
      %p163 = scmp.le.s32.totalorder 1, %s15
      %p164 = scmp.lt.s32.totalorder %s15, 5
      %p165 = pnand %p163, %p164
      %p166 = pneg %p165
      // Predicated region
      $region25: #{tpu_custom_call.1} parent=5 // pred_check
        _
      $region26: #{tpu_custom_call.1} parent=5 // pred_check_branch
        %168 = sbr.rel (%p165) target = $region28
      $region27: #{tpu_custom_call.1} parent=5 // pred_region
        %s169 = ssub.s32 %s15, 1
        // Predicated region
        $region29: #{tpu_custom_call.1} parent=27 // pred_check
          %p170 = pneg %p53
        $region30: #{tpu_custom_call.1} parent=27 // pred_check_branch
          %172 = sbr.rel (%p170) target = $region32
        $region31: #{tpu_custom_call.1} parent=27 // pred_region
          %173 = dma.done [#allocation3], 128
        $region32: #{tpu_custom_call.1} parent=27 // pred_fallthru
          _
        %s174 = sand.u32 %s66, 1
        %s175 = scalar_lea.sflag [#allocation6], %s174
        %s176 = sand.u32 %s66, 1
        %s177 = smul.addr %s176, 256
        %s178 = scalar_lea.vmem [#allocation5], %s177
        // Predicated region
        $region33: #{tpu_custom_call.1} parent=27 // pred_check
          %p179 = pneg %p79
        $region34: #{tpu_custom_call.1} parent=27 // pred_check_branch
          %181 = sbr.rel (%p179) target = $region36
        $region35: #{tpu_custom_call.1} parent=27 // pred_region
          %182 = dma.done %s175, 4096
        $region36: #{tpu_custom_call.1} parent=27 // pred_fallthru
          _
        %p183 = pneg %p53
        %p184 = pneg %p50
        %s185 = sand.u32 %s66, 1
        %s186 = scalar_lea.sflag [#allocation6], %s185
        %s187 = sand.u32 %s66, 1
        %s188 = smul.addr %s187, 256
        %s189 = scalar_lea.vmem [#allocation5], %s188
        %p190 = pneg %p79
        %p191 = pneg %p76
        %p192 = pneg %p107
        %p193 = pneg %p104
        %s194 = sand.u32 %s94, 1
        %s195 = scalar_lea.sflag [#allocation4], %s194
        %s196 = sand.u32 %s94, 1
        %s197 = smul.addr %s196, 64
        %s198 = scalar_lea.vmem [#allocation7], %s197
        %s199 = smul.u32 2, %s24
        %s200 = smul.u32 64, %s25
        %s201 = smul.u32 2, %s24
        %s202 = smul.u32 4, %s25
        %v204 = vld [vmem:[#allocation2] sm:$0xf]
        %v205 = vld [vmem:[#allocation2 + $0x4] sm:$0xf]
        %v206 = vld [vmem:[%s178] sm:$0xf]
        %v207 = vld [vmem:[%s178 + $0x4] sm:$0xf]
        %v208 = vld [vmem:[%s178 + $0x8] sm:$0xf]
        %v209 = vld [vmem:[%s178 + $0xc] sm:$0xf]
        %v210 = vld [vmem:[%s178 + $0x10] sm:$0xf]
        %v211 = vld [vmem:[%s178 + $0x14] sm:$0xf]
        %v212 = vld [vmem:[%s178 + $0x18] sm:$0xf]
        %v213 = vld [vmem:[%s178 + $0x1c] sm:$0xf]
        %v214 = vld [vmem:[%s178 + $0x20] sm:$0xf]
        %v215 = vld [vmem:[%s178 + $0x24] sm:$0xf]
        %v216 = vld [vmem:[%s178 + $0x28] sm:$0xf]
        %v217 = vld [vmem:[%s178 + $0x2c] sm:$0xf]
        %v218 = vld [vmem:[%s178 + $0x30] sm:$0xf]
        %v219 = vld [vmem:[%s178 + $0x34] sm:$0xf]
        %v220 = vld [vmem:[%s178 + $0x38] sm:$0xf]
        %v221 = vld [vmem:[%s178 + $0x3c] sm:$0xf]
        %v222 = vld [vmem:[%s178 + $0x40] sm:$0xf]
        %v223 = vld [vmem:[%s178 + $0x44] sm:$0xf]
        %v224 = vld [vmem:[%s178 + $0x48] sm:$0xf]
        %v225 = vld [vmem:[%s178 + $0x4c] sm:$0xf]
        %v226 = vld [vmem:[%s178 + $0x50] sm:$0xf]
        %v227 = vld [vmem:[%s178 + $0x54] sm:$0xf]
        %v228 = vld [vmem:[%s178 + $0x58] sm:$0xf]
        %v229 = vld [vmem:[%s178 + $0x5c] sm:$0xf]
        %v230 = vld [vmem:[%s178 + $0x60] sm:$0xf]
        %v231 = vld [vmem:[%s178 + $0x64] sm:$0xf]
        %v232 = vld [vmem:[%s178 + $0x68] sm:$0xf]
        %v233 = vld [vmem:[%s178 + $0x6c] sm:$0xf]
        %v234 = vld [vmem:[%s178 + $0x70] sm:$0xf]
        %v235 = vld [vmem:[%s178 + $0x74] sm:$0xf]
        %v236 = vld [vmem:[%s178 + $0x78] sm:$0xf]
        %v237 = vld [vmem:[%s178 + $0x7c] sm:$0xf]
        %v238 = vld [vmem:[%s178 + $0x80] sm:$0xf]
        %v239 = vld [vmem:[%s178 + $0x84] sm:$0xf]
        %v240 = vld [vmem:[%s178 + $0x88] sm:$0xf]
        %v241 = vld [vmem:[%s178 + $0x8c] sm:$0xf]
        %v242 = vld [vmem:[%s178 + $0x90] sm:$0xf]
        %v243 = vld [vmem:[%s178 + $0x94] sm:$0xf]
        %v244 = vld [vmem:[%s178 + $0x98] sm:$0xf]
        %v245 = vld [vmem:[%s178 + $0x9c] sm:$0xf]
        %v246 = vld [vmem:[%s178 + $0xa0] sm:$0xf]
        %v247 = vld [vmem:[%s178 + $0xa4] sm:$0xf]
        %v248 = vld [vmem:[%s178 + $0xa8] sm:$0xf]
        %v249 = vld [vmem:[%s178 + $0xac] sm:$0xf]
        %v250 = vld [vmem:[%s178 + $0xb0] sm:$0xf]
        %v251 = vld [vmem:[%s178 + $0xb4] sm:$0xf]
        %v252 = vld [vmem:[%s178 + $0xb8] sm:$0xf]
        %v253 = vld [vmem:[%s178 + $0xbc] sm:$0xf]
        %v254 = vld [vmem:[%s178 + $0xc0] sm:$0xf]
        %v255 = vld [vmem:[%s178 + $0xc4] sm:$0xf]
        %v256 = vld [vmem:[%s178 + $0xc8] sm:$0xf]
        %v257 = vld [vmem:[%s178 + $0xcc] sm:$0xf]
        %v258 = vld [vmem:[%s178 + $0xd0] sm:$0xf]
        %v259 = vld [vmem:[%s178 + $0xd4] sm:$0xf]
        %v260 = vld [vmem:[%s178 + $0xd8] sm:$0xf]
        %v261 = vld [vmem:[%s178 + $0xdc] sm:$0xf]
        %v262 = vld [vmem:[%s178 + $0xe0] sm:$0xf]
        %v263 = vld [vmem:[%s178 + $0xe4] sm:$0xf]
        %v264 = vld [vmem:[%s178 + $0xe8] sm:$0xf]
        %v265 = vld [vmem:[%s178 + $0xec] sm:$0xf]
        %v266 = vld [vmem:[%s178 + $0xf0] sm:$0xf]
        %v267 = vld [vmem:[%s178 + $0xf4] sm:$0xf]
        %v268 = vld [vmem:[%s178 + $0xf8] sm:$0xf]
        %v269 = vld [vmem:[%s178 + $0xfc] sm:$0xf]
        %v272 = vunpack.c.l.b16 %v204
        %v273 = vunpack.c.l.b16 %v205
        %v274 = vpack.c.b16 %v273, %v272
        %v340 = vunpack.c.l.b16 %v206
        %v341 = vunpack.c.l.b16 %v207
        %v342 = vunpack.c.l.b16 %v208
        %v343 = vunpack.c.l.b16 %v209
        %v344 = vunpack.c.l.b16 %v210
        %v345 = vunpack.c.l.b16 %v211
        %v346 = vunpack.c.l.b16 %v212
        %v347 = vunpack.c.l.b16 %v213
        %v348 = vunpack.c.l.b16 %v214
        %v349 = vunpack.c.l.b16 %v215
        %v350 = vunpack.c.l.b16 %v216
        %v351 = vunpack.c.l.b16 %v217
        %v352 = vunpack.c.l.b16 %v218
        %v353 = vunpack.c.l.b16 %v219
        %v354 = vunpack.c.l.b16 %v220
        %v355 = vunpack.c.l.b16 %v221
        %v356 = vunpack.c.l.b16 %v222
        %v357 = vunpack.c.l.b16 %v223
        %v358 = vunpack.c.l.b16 %v224
        %v359 = vunpack.c.l.b16 %v225
        %v360 = vunpack.c.l.b16 %v226
        %v361 = vunpack.c.l.b16 %v227
        %v362 = vunpack.c.l.b16 %v228
        %v363 = vunpack.c.l.b16 %v229
        %v364 = vunpack.c.l.b16 %v230
        %v365 = vunpack.c.l.b16 %v231
        %v366 = vunpack.c.l.b16 %v232
        %v367 = vunpack.c.l.b16 %v233
        %v368 = vunpack.c.l.b16 %v234
        %v369 = vunpack.c.l.b16 %v235
        %v370 = vunpack.c.l.b16 %v236
        %v371 = vunpack.c.l.b16 %v237
        %v372 = vunpack.c.l.b16 %v238
        %v373 = vunpack.c.l.b16 %v239
        %v374 = vunpack.c.l.b16 %v240
        %v375 = vunpack.c.l.b16 %v241
        %v376 = vunpack.c.l.b16 %v242
        %v377 = vunpack.c.l.b16 %v243
        %v378 = vunpack.c.l.b16 %v244
        %v379 = vunpack.c.l.b16 %v245
        %v380 = vunpack.c.l.b16 %v246
        %v381 = vunpack.c.l.b16 %v247
        %v382 = vunpack.c.l.b16 %v248
        %v383 = vunpack.c.l.b16 %v249
        %v384 = vunpack.c.l.b16 %v250
        %v385 = vunpack.c.l.b16 %v251
        %v386 = vunpack.c.l.b16 %v252
        %v387 = vunpack.c.l.b16 %v253
        %v388 = vunpack.c.l.b16 %v254
        %v389 = vunpack.c.l.b16 %v255
        %v390 = vunpack.c.l.b16 %v256
        %v391 = vunpack.c.l.b16 %v257
        %v392 = vunpack.c.l.b16 %v258
        %v393 = vunpack.c.l.b16 %v259
        %v394 = vunpack.c.l.b16 %v260
        %v395 = vunpack.c.l.b16 %v261
        %v396 = vunpack.c.l.b16 %v262
        %v397 = vunpack.c.l.b16 %v263
        %v398 = vunpack.c.l.b16 %v264
        %v399 = vunpack.c.l.b16 %v265
        %v400 = vunpack.c.l.b16 %v266
        %v401 = vunpack.c.l.b16 %v267
        %v402 = vunpack.c.l.b16 %v268
        %v403 = vunpack.c.l.b16 %v269
        %v404 = vpack.c.b16 %v341, %v340
        %v405 = vpack.c.b16 %v343, %v342
        %v406 = vpack.c.b16 %v345, %v344
        %v407 = vpack.c.b16 %v347, %v346
        %v408 = vpack.c.b16 %v349, %v348
        %v409 = vpack.c.b16 %v351, %v350
        %v410 = vpack.c.b16 %v353, %v352
        %v411 = vpack.c.b16 %v355, %v354
        %v412 = vpack.c.b16 %v357, %v356
        %v413 = vpack.c.b16 %v359, %v358
        %v414 = vpack.c.b16 %v361, %v360
        %v415 = vpack.c.b16 %v363, %v362
        %v416 = vpack.c.b16 %v365, %v364
        %v417 = vpack.c.b16 %v367, %v366
        %v418 = vpack.c.b16 %v369, %v368
        %v419 = vpack.c.b16 %v371, %v370
        %v420 = vpack.c.b16 %v373, %v372
        %v421 = vpack.c.b16 %v375, %v374
        %v422 = vpack.c.b16 %v377, %v376
        %v423 = vpack.c.b16 %v379, %v378
        %v424 = vpack.c.b16 %v381, %v380
        %v425 = vpack.c.b16 %v383, %v382
        %v426 = vpack.c.b16 %v385, %v384
        %v427 = vpack.c.b16 %v387, %v386
        %v428 = vpack.c.b16 %v389, %v388
        %v429 = vpack.c.b16 %v391, %v390
        %v430 = vpack.c.b16 %v393, %v392
        %v431 = vpack.c.b16 %v395, %v394
        %v432 = vpack.c.b16 %v397, %v396
        %v433 = vpack.c.b16 %v399, %v398
        %v434 = vpack.c.b16 %v401, %v400
        %v435 = vpack.c.b16 %v403, %v402
        %468 = vmatprep.subr.bf16.mxu0 0
        %469 = vmatpush1.bf16.xpose.msra.mxu0 %v404
        %470 = vmatprep.subr.bf16.mxu0 0
        %471 = vmatpush1.bf16.xpose.msra.mxu0 %v405
        %472 = vmatprep.subr.bf16.mxu0 0
        %473 = vmatpush1.bf16.xpose.msra.mxu0 %v406
        %474 = vmatprep.subr.bf16.mxu0 0
        %475 = vmatpush1.bf16.xpose.msra.mxu0 %v407
        %476 = vmatprep.subr.bf16.mxu0 0
        %477 = vmatpush1.bf16.xpose.msra.mxu0 %v408
        %478 = vmatprep.subr.bf16.mxu0 0
        %479 = vmatpush1.bf16.xpose.msra.mxu0 %v409
        %480 = vmatprep.subr.bf16.mxu0 0
        %481 = vmatpush1.bf16.xpose.msra.mxu0 %v410
        %482 = vmatprep.subr.bf16.mxu0 0
        %483 = vmatpush1.bf16.xpose.msra.mxu0 %v411
        %484 = vmatprep.subr.bf16.mxu0 0
        %485 = vmatpush1.bf16.xpose.msra.mxu0 %v412
        %486 = vmatprep.subr.bf16.mxu0 0
        %487 = vmatpush1.bf16.xpose.msra.mxu0 %v413
        %488 = vmatprep.subr.bf16.mxu0 0
        %489 = vmatpush1.bf16.xpose.msra.mxu0 %v414
        %490 = vmatprep.subr.bf16.mxu0 0
        %491 = vmatpush1.bf16.xpose.msra.mxu0 %v415
        %492 = vmatprep.subr.bf16.mxu0 0
        %493 = vmatpush1.bf16.xpose.msra.mxu0 %v416
        %494 = vmatprep.subr.bf16.mxu0 0
        %495 = vmatpush1.bf16.xpose.msra.mxu0 %v417
        %496 = vmatprep.subr.bf16.mxu0 0
        %497 = vmatpush1.bf16.xpose.msra.mxu0 %v418
        %498 = vmatprep.subr.bf16.mxu0 0
        %499 = vmatpush1.bf16.xpose.msra.mxu0 %v419
        %500 = vmatprep.mubr.bf16.mxu0 0
        %501 = vmatmul.mubr.bf16.gmra.mrb[0].mxu0 %v274
        %v502 = vpop.f32.mrb[0].mxu0
        %v503 = vadd.f32 0.0, %v502
        %v504 = vpop.f32.mrb[0].mxu0
        %v505 = vadd.f32 0.0, %v504
        %v506 = vpop.f32.mrb[0].mxu0
        %v507 = vadd.f32 0.0, %v506
        %v508 = vpop.f32.mrb[0].mxu0
        %v509 = vadd.f32 0.0, %v508
        %510 = vdwg.mxu0
        %511 = vmatprep.subr.bf16.mxu0 0
        %512 = vmatpush1.bf16.xpose.msra.mxu0 %v420
        %513 = vmatprep.subr.bf16.mxu0 0
        %514 = vmatpush1.bf16.xpose.msra.mxu0 %v421
        %515 = vmatprep.subr.bf16.mxu0 0
        %516 = vmatpush1.bf16.xpose.msra.mxu0 %v422
        %517 = vmatprep.subr.bf16.mxu0 0
        %518 = vmatpush1.bf16.xpose.msra.mxu0 %v423
        %519 = vmatprep.subr.bf16.mxu0 0
        %520 = vmatpush1.bf16.xpose.msra.mxu0 %v424
        %521 = vmatprep.subr.bf16.mxu0 0
        %522 = vmatpush1.bf16.xpose.msra.mxu0 %v425
        %523 = vmatprep.subr.bf16.mxu0 0
        %524 = vmatpush1.bf16.xpose.msra.mxu0 %v426
        %525 = vmatprep.subr.bf16.mxu0 0
        %526 = vmatpush1.bf16.xpose.msra.mxu0 %v427
        %527 = vmatprep.subr.bf16.mxu0 0
        %528 = vmatpush1.bf16.xpose.msra.mxu0 %v428
        %529 = vmatprep.subr.bf16.mxu0 0
        %530 = vmatpush1.bf16.xpose.msra.mxu0 %v429
        %531 = vmatprep.subr.bf16.mxu0 0
        %532 = vmatpush1.bf16.xpose.msra.mxu0 %v430
        %533 = vmatprep.subr.bf16.mxu0 0
        %534 = vmatpush1.bf16.xpose.msra.mxu0 %v431
        %535 = vmatprep.subr.bf16.mxu0 0
        %536 = vmatpush1.bf16.xpose.msra.mxu0 %v432
        %537 = vmatprep.subr.bf16.mxu0 0
        %538 = vmatpush1.bf16.xpose.msra.mxu0 %v433
        %539 = vmatprep.subr.bf16.mxu0 0
        %540 = vmatpush1.bf16.xpose.msra.mxu0 %v434
        %541 = vmatprep.subr.bf16.mxu0 0
        %542 = vmatpush1.bf16.xpose.msra.mxu0 %v435
        %543 = vmatprep.mubr.bf16.mxu0 0
        %544 = vmatmul.mubr.bf16.gmra.mrb[0].mxu0 %v274
        %v545 = vpop.f32.mrb[0].mxu0
        %v546 = vadd.f32 0.0, %v545
        %v547 = vpop.f32.mrb[0].mxu0
        %v548 = vadd.f32 0.0, %v547
        %v549 = vpop.f32.mrb[0].mxu0
        %v550 = vadd.f32 0.0, %v549
        %v551 = vpop.f32.mrb[0].mxu0
        %v552 = vadd.f32 0.0, %v551
        %553 = vdwg.mxu0
        %v554 = vxor.u32 %v503, 2147483648
        %v555 = vxor.u32 %v505, 2147483648
        %v556 = vxor.u32 %v546, 2147483648
        %v557 = vxor.u32 %v548, 2147483648
        %v558 = vxor.u32 %v507, 2147483648
        %v559 = vxor.u32 %v509, 2147483648
        %v560 = vxor.u32 %v550, 2147483648
        %v561 = vxor.u32 %v552, 2147483648
        %v562 = vmul.f32 %v554, 1.442695
        %v563 = vpow.pop %v562
        %v564 = vmul.f32 %v555, 1.442695
        %v565 = vpow.pop %v564
        %v566 = vmul.f32 %v556, 1.442695
        %v567 = vpow.pop %v566
        %v568 = vmul.f32 %v557, 1.442695
        %v569 = vpow.pop %v568
        %v570 = vmul.f32 %v558, 1.442695
        %v571 = vpow.pop %v570
        %v572 = vmul.f32 %v559, 1.442695
        %v573 = vpow.pop %v572
        %v574 = vmul.f32 %v560, 1.442695
        %v575 = vpow.pop %v574
        %v576 = vmul.f32 %v561, 1.442695
        %v577 = vpow.pop %v576
        %v578 = vadd.f32 %v563, 1.0
        %v579 = vadd.f32 %v565, 1.0
        %v580 = vadd.f32 %v567, 1.0
        %v581 = vadd.f32 %v569, 1.0
        %v582 = vadd.f32 %v571, 1.0
        %v583 = vadd.f32 %v573, 1.0
        %v584 = vadd.f32 %v575, 1.0
        %v585 = vadd.f32 %v577, 1.0
        %v586 = vrcp.pop %v578
        %v587 = vmul.f32 1.0, %v586
        %v588 = vrcp.pop %v579
        %v589 = vmul.f32 1.0, %v588
        %v590 = vrcp.pop %v580
        %v591 = vmul.f32 1.0, %v590
        %v592 = vrcp.pop %v581
        %v593 = vmul.f32 1.0, %v592
        %v594 = vrcp.pop %v582
        %v595 = vmul.f32 1.0, %v594
        %v596 = vrcp.pop %v583
        %v597 = vmul.f32 1.0, %v596
        %v598 = vrcp.pop %v584
        %v599 = vmul.f32 1.0, %v598
        %v600 = vrcp.pop %v585
        %v601 = vmul.f32 1.0, %v600
        %602 = vst [vmem:[%s198] sm:$0xff] %v587
        %603 = vst [vmem:[%s198 + $0x8] sm:$0xff] %v589
        %604 = vst [vmem:[%s198 + $0x10] sm:$0xff] %v591
        %605 = vst [vmem:[%s198 + $0x18] sm:$0xff] %v593
        %606 = vst [vmem:[%s198 + $0x20] sm:$0xff] %v595
        %607 = vst [vmem:[%s198 + $0x28] sm:$0xff] %v597
        %608 = vst [vmem:[%s198 + $0x30] sm:$0xff] %v599
        %609 = vst [vmem:[%s198 + $0x38] sm:$0xff] %v601
        %s610 = sand.u32 %s94, 1
        %s611 = scalar_lea.sflag [#allocation4], %s610
        %s612 = sand.u32 %s94, 1
        %s613 = smul.addr %s612, 64
        %s614 = scalar_lea.vmem [#allocation7], %s613
        // Predicated region
        $region37: #{tpu_custom_call.1} parent=27 // pred_check
          %p615 = pneg %p104
        $region38: #{tpu_custom_call.1} parent=27 // pred_check_branch
          %617 = sbr.rel (%p615) target = $region40
        $region39: #{tpu_custom_call.1} parent=27 // pred_region
          %s618 = smul.u32 2, %s24
          %s619 = smul.u32 4, %s25
          %s621 = ssub.s32 1024, 1024
          %622 = vsyncadd %s611, %s621
          %s623 = smul.addr %s618, 16
          %s624 = sadd.s32 %s619, %s623
          %s625 = smul.addr %s624, 128
          %s626 = scalar_lea.hbm %s2, %s625
          %s627 = sshll.u32 %s614, 4
          %s628 = int_to_ptr.vmem [resolvable:$true] %s627
          %633 = dma.vmem_to_hbm [thread:$0]  %s628, 1024, %s626, %s611, 512, 2048, 32
        $region40: #{tpu_custom_call.1} parent=27 // pred_fallthru
          _
      $region28: #{tpu_custom_call.1} parent=5 // pred_fallthru
        _
      %p634 = scmp.le.s32.totalorder 2, %s15
      // Predicated region
      $region41: #{tpu_custom_call.1} parent=5 // pred_check
        %p635 = pneg %p634
      $region42: #{tpu_custom_call.1} parent=5 // pred_check_branch
        %637 = sbr.rel (%p635) target = $region44
      $region43: #{tpu_custom_call.1} parent=5 // pred_region
        %s638 = ssub.s32 %s15, 2
        // Predicated region
        $region45: #{tpu_custom_call.1} parent=43 // pred_check
          %p639 = pneg %p110
        $region46: #{tpu_custom_call.1} parent=43 // pred_check_branch
          %641 = sbr.rel (%p639) target = $region48
        $region47: #{tpu_custom_call.1} parent=43 // pred_region
          %s642 = sand.u32 %s95, 1
          %s643 = scalar_lea.sflag [#allocation4], %s642
          %s644 = sand.u32 %s95, 1
          %s645 = smul.addr %s644, 64
          %s646 = scalar_lea.vmem [#allocation7], %s645
          %647 = dma.done %s643, 1024
        $region48: #{tpu_custom_call.1} parent=43 // pred_fallthru
          _
      $region44: #{tpu_custom_call.1} parent=5 // pred_fallthru
        _
    $region6: #{tpu_custom_call.1} parent=1 // loop_footer
      %s19 = sadd.s32 1, %s15
    $region7: #{tpu_custom_call.1} parent=1 // loop_footer_branch
      %14 = sbr.rel target = $region3
    $region8: #{tpu_custom_call.1} parent=1 // loop_exit
      _
    %648 = vsyncpa [#allocation3], 1
    %s649 = scalar_lea.sflag [#allocation3], 1
    %650 = vsyncpa %s649, 1
    %651 = vsyncpa [#allocation6], 1
    %s652 = scalar_lea.sflag [#allocation6], 1
    %653 = vsyncpa %s652, 1
    %654 = vsyncpa [#allocation4], 1
    %s655 = scalar_lea.sflag [#allocation4], 1
    %656 = vsyncpa %s655, 1

</llo_original>
